<compile_context>
chip_gen: v7x
topology: tpu7x:2x2x1
jax: 0.10.0
libtpu: 0.0.40
codegen_flags: <defaults>
</compile_context>

<pallas_src>
import jax
import jax.numpy as jnp
from jax import lax
from jax.experimental import pallas as pl
from jax.experimental.pallas import tpu as pltpu


def _round_up(x, m):
    return (x + m - 1) // m * m


def _cdiv(a, b):
    return (a + b - 1) // b


def _make_textcnn_kernel(TB, S, E, NFT, F_pad, T, pad_t, max_fs, K_pad):
    n_groups = (TB * S) // 8  # gather writes 8 rows (one f32 sublane tile) per store

    def kernel(ids_ref, tbl_ref, w_all_ref, conv_b_ref, mask_ref, wt_ref, lin_b_ref,
               out_ref, emb_buf):
        # ids_ref:    SMEM (B_pad*S,) int32   scalar-prefetched token ids
        # tbl_ref:    VMEM (V, E) f32         resident embedding table
        # w_all_ref:  VMEM (E, F_pad)         fused tap-major conv weights (zero-padded lanes)
        # conv_b_ref: VMEM (1, NFT) f32       conv biases (size-major)
        # mask_ref:   VMEM (T, NFT) f32       0 where pooling position valid for that size, -1e30 else
        # wt_ref:     VMEM (K_pad, C_pad)     final linear weight (transposed, padded)
        # lin_b_ref:  VMEM (1, C_pad) f32     final bias
        # out_ref:    VMEM (TB, C_pad) f32
        # emb_buf:    VMEM (TB*S, E) f32      gathered embedding rows for this batch tile
        base = pl.program_id(0) * (TB * S)

        # ---- fused embedding gather: SMEM ids -> dynamic table rows -> scratch slab ---------
        def gather_group(g, carry):
            rows = [tbl_ref[pl.ds(ids_ref[base + g * 8 + j], 1), :] for j in range(8)]
            dst = pl.multiple_of(g * 8, 8)                       # sublane-tile-aligned store
            emb_buf[pl.ds(dst, 8), :] = jnp.concatenate(rows, axis=0)
            return carry

        lax.fori_loop(0, n_groups, gather_group, 0)

        # ---- one MXU matmul for every tap of every filter size (tap-major layout) -----------
        emb2 = emb_buf[...].astype(w_all_ref.dtype)              # (TB*S, E)
        y = jnp.dot(emb2, w_all_ref[...], preferred_element_type=jnp.float32)
        y3 = y.reshape(TB, S, F_pad)
        if pad_t:  # zero rows so smaller filter sizes can read "past" the real sequence end
            y3 = jnp.concatenate(
                [y3, jnp.zeros((TB, pad_t, F_pad), jnp.float32)], axis=1)

        # ---- shifted tap-sum: ONE NF_total-wide add per tap, then masked max over time ------
        acc = y3[:, 0:T, 0:NFT]
        for k in range(1, max_fs):
            acc = acc + y3[:, k:k + T, k * NFT:(k + 1) * NFT]
        pooled = jnp.max(acc + mask_ref[...][None, :, :], axis=1)  # (TB, NFT)

        # conv bias + ReLU hoisted out of the time loop (bias const over t, ReLU monotone,
        # every filter size has >= 1 valid pooling position).
        h = jnp.maximum(pooled + conv_b_ref[...], 0.0)
        if K_pad > NFT:
            h = jnp.concatenate(
                [h, jnp.zeros((TB, K_pad - NFT), jnp.float32)], axis=-1)

        # ---- final linear --------------------------------------------------------------------
        logits = jnp.dot(h.astype(wt_ref.dtype), wt_ref[...],
                         preferred_element_type=jnp.float32) + lin_b_ref[...]
        out_ref[...] = logits.astype(out_ref.dtype)

    return kernel


def textcnn_forward(X, params, *, filter_sizes, num_filters, num_classes,
                    compute_dtype=jnp.bfloat16, batch_tile=256):
    filter_sizes = tuple(int(fs) for fs in filter_sizes)
    n_sizes = len(filter_sizes)
    NF = int(num_filters)
    NFT = NF * n_sizes
    C = int(num_classes)
    max_fs, min_fs = max(filter_sizes), min(filter_sizes)

    B, S = X.shape
    V, E = params["embedding"].shape
    assert S >= max_fs, "sequence shorter than largest filter size"

    T = S - min_fs + 1                      # pooling positions computed jointly for all sizes
    pad_t = max_fs - min_fs                 # zero time-rows appended in-kernel
    F_real = max_fs * NFT
    F_pad = _round_up(F_real, 128)          # lane-dense fused-matmul output
    K_pad = _round_up(NFT, 8)               # sublane-aligned K for the final matmul
    C_pad = _round_up(C, 128)               # lane-dense logits
    itemsize = jnp.dtype(compute_dtype).itemsize

    # ---- fused tap-major conv weights: column k*NFT + i*NF + f = tap k of filter f of size i --
    blocks = []
    for k in range(max_fs):
        per_size = []
        for i, fs in enumerate(filter_sizes):
            if k < fs:
                per_size.append(jnp.transpose(params["conv_w"][i][:, 0, k, :]))  # (E, NF)
            else:
                per_size.append(jnp.zeros((E, NF), jnp.float32))                 # missing tap
        blocks.append(jnp.concatenate(per_size, axis=1))                          # (E, NFT)
    w_all = jnp.concatenate(blocks, axis=1)                                       # (E, F_real)
    w_all = jnp.pad(w_all, ((0, 0), (0, F_pad - F_real))).astype(compute_dtype)

    conv_b = jnp.concatenate([params["conv_b"][i] for i in range(n_sizes)])
    conv_b = conv_b.reshape(1, NFT).astype(jnp.float32)

    # pooling position t is valid for size i iff t <= S - fs_i
    thr = jnp.repeat(jnp.asarray([S - fs for fs in filter_sizes], jnp.int32), NF)[None, :]
    pool_mask = jnp.where(jnp.arange(T, dtype=jnp.int32)[:, None] <= thr,
                          0.0, -1e30).astype(jnp.float32)                         # (T, NFT)

    wt = jnp.transpose(params["linear_w"]).astype(jnp.float32)                    # (NFT, C)
    wt = jnp.pad(wt, ((0, K_pad - NFT), (0, C_pad - C))).astype(compute_dtype)
    lin_b = jnp.pad(params["bias"].reshape(1, C).astype(jnp.float32),
                    ((0, 0), (0, C_pad - C)))
    emb_tbl = params["embedding"].astype(jnp.float32)   # f32 table: exact gathered rows

    # ---- generation-aware batch tiling ---------------------------------------------------------
    try:
        vmem_cap = int(pltpu.get_tpu_info().vmem_capacity_bytes)
    except Exception:
        vmem_cap = 64 * 2 ** 20             # conservative default (v7x per-TensorCore VMEM)

    def est_vmem(tb):
        b = tb * S * E * 4                  # gather scratch (f32)
        b += tb * S * E * itemsize          # cast matmul operand
        b += tb * S * F_pad * 4             # fused-matmul result
        b += tb * (S + pad_t) * F_pad * 4   # time-padded copy
        b += 2 * tb * T * NFT * 4           # tap-sum accumulator + masked copy
        b += 2 * tb * C_pad * 4             # double-buffered output block
        b += V * E * 4 + E * F_pad * itemsize + K_pad * C_pad * itemsize
        b += (T * NFT + NFT + 2 * C_pad) * 4
        return b + (4 << 20)                # headroom for compiler temporaries

    B_pad8 = _round_up(B, 8)
    TB = max(8, (min(batch_tile, B_pad8) // 8) * 8)
    if _cdiv(B_pad8, TB) < 2 and B_pad8 >= 16:
        TB = max(8, _round_up(_cdiv(B_pad8, 2), 8))    # >=2 grid blocks -> both v7x TCs busy
    while TB > 8 and est_vmem(TB) > vmem_cap // 2:     # v7x 64 MiB/TC, v5e/v6e 128 MiB
        TB = max(8, ((TB // 2) // 8) * 8)
    n_blk = _cdiv(B_pad8, TB)
    B_pad = n_blk * TB
    vmem_limit = int(min(vmem_cap * 3 // 4, max(2 * est_vmem(TB), 32 * 2 ** 20)))

    # pad the cheap int32 ids (not f32 activations) to the tile multiple
    ids = X.astype(jnp.int32)
    if B_pad != B:
        ids = jnp.pad(ids, ((0, B_pad - B), (0, 0)))
    ids = ids.reshape(-1)

    flops = 2 * B_pad * S * E * F_pad + 2 * B_pad * K_pad * C_pad
    bytes_accessed = (ids.size * 4 + V * E * 4 + E * F_pad * itemsize
                      + (T * NFT + NFT + C_pad) * 4 + K_pad * C_pad * itemsize
                      + B_pad * C_pad * 4)

    kernel = _make_textcnn_kernel(TB, S, E, NFT, F_pad, T, pad_t, max_fs, K_pad)

    out = pl.pallas_call(
        kernel,
        out_shape=jax.ShapeDtypeStruct((B_pad, C_pad), jnp.float32),
        grid_spec=pltpu.PrefetchScalarGridSpec(
            num_scalar_prefetch=1,                                     # token ids -> SMEM
            grid=(n_blk,),
            in_specs=[
                pl.BlockSpec((V, E), lambda i, _: (0, 0)),             # embedding table (resident)
                pl.BlockSpec((E, F_pad), lambda i, _: (0, 0)),         # fused conv weights
                pl.BlockSpec((1, NFT), lambda i, _: (0, 0)),           # conv biases
                pl.BlockSpec((T, NFT), lambda i, _: (0, 0)),           # pooling validity mask
                pl.BlockSpec((K_pad, C_pad), lambda i, _: (0, 0)),     # final linear weight
                pl.BlockSpec((1, C_pad), lambda i, _: (0, 0)),         # final bias
            ],
            out_specs=pl.BlockSpec((TB, C_pad), lambda i, _: (i, 0)),
            scratch_shapes=[pltpu.VMEM((TB * S, E), jnp.float32)],     # gathered embeddings
        ),
        compiler_params=pltpu.CompilerParams(
            dimension_semantics=("parallel",),                         # megacore split on v7x
            vmem_limit_bytes=vmem_limit),
        cost_estimate=pl.CostEstimate(flops=flops, transcendentals=0,
                                      bytes_accessed=int(bytes_accessed)),
    )(ids, emb_tbl, w_all, conv_b, pool_mask, wt, lin_b)

    return out[:B, :C]


def textcnn_reference(X, params, *, filter_sizes, num_filters, num_classes):
    """Pure-JAX reference mirroring the PyTorch forward."""
    emb = jnp.take(params["embedding"], X, axis=0)  # (B, S, E)
    B, S, E = emb.shape
    feats = []
    for i, fs in enumerate(filter_sizes):
        w = params["conv_w"][i][:, 0]               # (NF, fs, E)
        b = params["conv_b"][i]                     # (NF,)
        n_pos = S - fs + 1
        scores = jnp.stack(
            [jnp.einsum("bse,fse->bf", emb[:, t:t + fs, :], w) for t in range(n_pos)],
            axis=1,
        ) + b                                       # (B, n_pos, NF)
        feats.append(jnp.max(jax.nn.relu(scores), axis=1))
    h = jnp.concatenate(feats, axis=-1)             # (B, NF * n_sizes)
    return h @ params["linear_w"].T + params["bias"]


if __name__ == "__main__":
    # small, module-consistent config
    vocab_size = 50
    embedding_size = 32
    num_filters = 8
    filter_sizes = (2, 3, 4)
    num_classes = 4
    sequence_length = 8
    batch = 2
    num_filters_total = num_filters * len(filter_sizes)

    key = jax.random.PRNGKey(0)
    k_emb, k_x, k_lw, *k_conv = jax.random.split(key, 3 + 2 * len(filter_sizes))

    params = {
        "embedding": jax.random.normal(k_emb, (vocab_size, embedding_size), jnp.float32) * 0.1,
        "conv_w": [
            jax.random.normal(k_conv[2 * i],
                              (num_filters, 1, fs, embedding_size), jnp.float32) * 0.1
            for i, fs in enumerate(filter_sizes)
        ],
        "conv_b": [
            jax.random.normal(k_conv[2 * i + 1], (num_filters,), jnp.float32) * 0.1
            for i, fs in enumerate(filter_sizes)
        ],
        "linear_w": jax.random.normal(k_lw, (num_classes, num_filters_total), jnp.float32) * 0.1,
        "bias": jnp.ones((num_classes,), jnp.float32),   # nn.Parameter(torch.ones(...))
    }

    X = jax.random.randint(k_x, (batch, sequence_length), 0, vocab_size, dtype=jnp.int32)

    ref = textcnn_reference(
        X, params,
        filter_sizes=filter_sizes, num_filters=num_filters, num_classes=num_classes,
    )

    # default path: bf16 matmul operands, f32 accumulation (looser tolerance)
    out_bf16 = jax.block_until_ready(textcnn_forward(
        X, params,
        filter_sizes=filter_sizes, num_filters=num_filters, num_classes=num_classes,
    ))
    assert out_bf16.shape == (batch, num_classes)
    assert jnp.allclose(out_bf16, ref, atol=3e-2, rtol=3e-2), (out_bf16, ref)

    # strict f32 path (tight tolerance)
    out_f32 = jax.block_until_ready(textcnn_forward(
        X, params,
        filter_sizes=filter_sizes, num_filters=num_filters, num_classes=num_classes,
        compute_dtype=jnp.float32,
    ))
    assert jnp.allclose(out_f32, ref, atol=1e-4, rtol=1e-4), (out_f32, ref)

    print("KERNEL_OK")
</pallas_src>

<mosaic_0001>
module attributes {stable_mosaic.version = 11 : i64} {
  func.func @kernel(%arg0: i32, %arg1: memref<64xi32, #tpu.memory_space<smem>>, %arg2: memref<50x32xf32, #tpu.memory_space<vmem>>, %arg3: memref<32x128xbf16, #tpu.memory_space<vmem>>, %arg4: memref<1x24xf32, #tpu.memory_space<vmem>>, %arg5: memref<7x24xf32, #tpu.memory_space<vmem>>, %arg6: memref<24x128xbf16, #tpu.memory_space<vmem>>, %arg7: memref<1x128xf32, #tpu.memory_space<vmem>>, %arg8: memref<8x128xf32, #tpu.memory_space<vmem>>, %arg9: memref<64x32xf32, #tpu.memory_space<vmem>>) attributes {dimension_semantics = [#tpu.dimension_semantics<parallel>], iteration_bounds = array<i64: 1>, scalar_prefetch = 1 : i64, scratch_operands = 1 : i64, tpu.core_type = #tpu.core_type<tc>, window_params = [{pipeline_mode = #tpu.pipeline_mode<synchronous>, transform_indices = @transform_0, window_bounds = array<i64: 50, 32>}, {pipeline_mode = #tpu.pipeline_mode<synchronous>, transform_indices = @transform_1, window_bounds = array<i64: 32, 128>}, {pipeline_mode = #tpu.pipeline_mode<synchronous>, transform_indices = @transform_2, window_bounds = array<i64: 1, 24>}, {pipeline_mode = #tpu.pipeline_mode<synchronous>, transform_indices = @transform_3, window_bounds = array<i64: 7, 24>}, {pipeline_mode = #tpu.pipeline_mode<synchronous>, transform_indices = @transform_4, window_bounds = array<i64: 24, 128>}, {pipeline_mode = #tpu.pipeline_mode<synchronous>, transform_indices = @transform_5, window_bounds = array<i64: 1, 128>}, {transform_indices = @transform_6, window_bounds = array<i64: 8, 128>}]} {
    %c64_i32 = arith.constant 64 : i32
    %0 = arith.muli %arg0, %c64_i32 : i32
    %c0_i32 = arith.constant 0 : i32
    %c8_i32 = arith.constant 8 : i32
    %1 = arith.addi %c0_i32, %c8_i32 : i32
    %c1_i32 = arith.constant 1 : i32
    scf.for %arg10 = %c0_i32 to %1 step %c1_i32  : i32 {
      %c8_i32_18 = arith.constant 8 : i32
      %33 = arith.muli %arg10, %c8_i32_18 : i32
      %34 = arith.addi %0, %33 : i32
      %c0_i32_19 = arith.constant 0 : i32
      %35 = arith.addi %34, %c0_i32_19 : i32
      %36 = arith.index_cast %35 : i32 to index
      %37 = memref.load %arg1[%36] : memref<64xi32, #tpu.memory_space<smem>>
      %38 = arith.index_cast %37 : i32 to index
      %c0_20 = arith.constant 0 : index
      %39 = vector.load %arg2[%38, %c0_20] : memref<50x32xf32, #tpu.memory_space<vmem>>, vector<1x32xf32>
      %c8_i32_21 = arith.constant 8 : i32
      %40 = arith.muli %arg10, %c8_i32_21 : i32
      %41 = arith.addi %0, %40 : i32
      %c1_i32_22 = arith.constant 1 : i32
      %42 = arith.addi %41, %c1_i32_22 : i32
      %43 = arith.index_cast %42 : i32 to index
      %44 = memref.load %arg1[%43] : memref<64xi32, #tpu.memory_space<smem>>
      %45 = arith.index_cast %44 : i32 to index
      %c0_23 = arith.constant 0 : index
      %46 = vector.load %arg2[%45, %c0_23] : memref<50x32xf32, #tpu.memory_space<vmem>>, vector<1x32xf32>
      %c8_i32_24 = arith.constant 8 : i32
      %47 = arith.muli %arg10, %c8_i32_24 : i32
      %48 = arith.addi %0, %47 : i32
      %c2_i32 = arith.constant 2 : i32
      %49 = arith.addi %48, %c2_i32 : i32
      %50 = arith.index_cast %49 : i32 to index
      %51 = memref.load %arg1[%50] : memref<64xi32, #tpu.memory_space<smem>>
      %52 = arith.index_cast %51 : i32 to index
      %c0_25 = arith.constant 0 : index
      %53 = vector.load %arg2[%52, %c0_25] : memref<50x32xf32, #tpu.memory_space<vmem>>, vector<1x32xf32>
      %c8_i32_26 = arith.constant 8 : i32
      %54 = arith.muli %arg10, %c8_i32_26 : i32
      %55 = arith.addi %0, %54 : i32
      %c3_i32 = arith.constant 3 : i32
      %56 = arith.addi %55, %c3_i32 : i32
      %57 = arith.index_cast %56 : i32 to index
      %58 = memref.load %arg1[%57] : memref<64xi32, #tpu.memory_space<smem>>
      %59 = arith.index_cast %58 : i32 to index
      %c0_27 = arith.constant 0 : index
      %60 = vector.load %arg2[%59, %c0_27] : memref<50x32xf32, #tpu.memory_space<vmem>>, vector<1x32xf32>
      %c8_i32_28 = arith.constant 8 : i32
      %61 = arith.muli %arg10, %c8_i32_28 : i32
      %62 = arith.addi %0, %61 : i32
      %c4_i32 = arith.constant 4 : i32
      %63 = arith.addi %62, %c4_i32 : i32
      %64 = arith.index_cast %63 : i32 to index
      %65 = memref.load %arg1[%64] : memref<64xi32, #tpu.memory_space<smem>>
      %66 = arith.index_cast %65 : i32 to index
      %c0_29 = arith.constant 0 : index
      %67 = vector.load %arg2[%66, %c0_29] : memref<50x32xf32, #tpu.memory_space<vmem>>, vector<1x32xf32>
      %c8_i32_30 = arith.constant 8 : i32
      %68 = arith.muli %arg10, %c8_i32_30 : i32
      %69 = arith.addi %0, %68 : i32
      %c5_i32 = arith.constant 5 : i32
      %70 = arith.addi %69, %c5_i32 : i32
      %71 = arith.index_cast %70 : i32 to index
      %72 = memref.load %arg1[%71] : memref<64xi32, #tpu.memory_space<smem>>
      %73 = arith.index_cast %72 : i32 to index
      %c0_31 = arith.constant 0 : index
      %74 = vector.load %arg2[%73, %c0_31] : memref<50x32xf32, #tpu.memory_space<vmem>>, vector<1x32xf32>
      %c8_i32_32 = arith.constant 8 : i32
      %75 = arith.muli %arg10, %c8_i32_32 : i32
      %76 = arith.addi %0, %75 : i32
      %c6_i32 = arith.constant 6 : i32
      %77 = arith.addi %76, %c6_i32 : i32
      %78 = arith.index_cast %77 : i32 to index
      %79 = memref.load %arg1[%78] : memref<64xi32, #tpu.memory_space<smem>>
      %80 = arith.index_cast %79 : i32 to index
      %c0_33 = arith.constant 0 : index
      %81 = vector.load %arg2[%80, %c0_33] : memref<50x32xf32, #tpu.memory_space<vmem>>, vector<1x32xf32>
      %c8_i32_34 = arith.constant 8 : i32
      %82 = arith.muli %arg10, %c8_i32_34 : i32
      %83 = arith.addi %0, %82 : i32
      %c7_i32 = arith.constant 7 : i32
      %84 = arith.addi %83, %c7_i32 : i32
      %85 = arith.index_cast %84 : i32 to index
      %86 = memref.load %arg1[%85] : memref<64xi32, #tpu.memory_space<smem>>
      %87 = arith.index_cast %86 : i32 to index
      %c0_35 = arith.constant 0 : index
      %88 = vector.load %arg2[%87, %c0_35] : memref<50x32xf32, #tpu.memory_space<vmem>>, vector<1x32xf32>
      %c8_i32_36 = arith.constant 8 : i32
      %89 = arith.muli %arg10, %c8_i32_36 : i32
      %90 = tpu.assume_multiple %89, 8 : i32
      %91 = tpu.concatenate %39, %46, %53, %60, %67, %74, %81, %88 in 0 : vector<1x32xf32>, vector<1x32xf32>, vector<1x32xf32>, vector<1x32xf32>, vector<1x32xf32>, vector<1x32xf32>, vector<1x32xf32>, vector<1x32xf32> -> vector<8x32xf32>
      %92 = arith.index_cast %90 : i32 to index
      %c0_37 = arith.constant 0 : index
      %93 = vector.load %arg9[%92, %c0_37] : memref<64x32xf32, #tpu.memory_space<vmem>>, vector<8x32xf32>
      tpu.vector_store %arg9[%92, %c0_37], %91 {strides = array<i32>} : memref<64x32xf32, #tpu.memory_space<vmem>>, vector<8x32xf32>,
    }
    %c8_i32_0 = arith.constant 8 : i32
    %c0 = arith.constant 0 : index
    %c0_1 = arith.constant 0 : index
    %2 = vector.load %arg9[%c0, %c0_1] : memref<64x32xf32, #tpu.memory_space<vmem>>, vector<64x32xf32>
    %3 = arith.truncf %2 : vector<64x32xf32> to vector<64x32xbf16>
    %c0_2 = arith.constant 0 : index
    %c0_3 = arith.constant 0 : index
    %4 = vector.load %arg3[%c0_2, %c0_3] : memref<32x128xbf16, #tpu.memory_space<vmem>>, vector<32x128xbf16>
    %cst = arith.constant dense<0.000000e+00> : vector<64x128xf32>
    %5 = tpu.matmul %3, %4, %cst {dimension_numbers = #tpu.dot_dimension_numbers<[1], [0], [0], [1], [0, 0, 1, 1], [], []>} : vector<64x32xbf16>, vector<32x128xbf16>, vector<64x128xf32> -> vector<64x128xf32>
    %6 = vector.shape_cast %5 : vector<64x128xf32> to vector<8x8x128xf32>
    %cst_4 = arith.constant 0.000000e+00 : f32
    %7 = vector.broadcast %cst_4 : f32 to vector<8x2x128xf32>
    %8 = tpu.concatenate %6, %7 in 1 : vector<8x8x128xf32>, vector<8x2x128xf32> -> vector<8x10x128xf32>
    %9 = vector.extract_strided_slice %8 {offsets = [0, 0, 0], sizes = [8, 7, 24], strides = [1, 1, 1]} : vector<8x10x128xf32> to vector<8x7x24xf32>
    %10 = vector.extract_strided_slice %8 {offsets = [0, 1, 24], sizes = [8, 7, 24], strides = [1, 1, 1]} : vector<8x10x128xf32> to vector<8x7x24xf32>
    %11 = arith.addf %9, %10 : vector<8x7x24xf32>
    %12 = vector.extract_strided_slice %8 {offsets = [0, 2, 48], sizes = [8, 7, 24], strides = [1, 1, 1]} : vector<8x10x128xf32> to vector<8x7x24xf32>
    %13 = arith.addf %11, %12 : vector<8x7x24xf32>
    %14 = vector.extract_strided_slice %8 {offsets = [0, 3, 72], sizes = [8, 7, 24], strides = [1, 1, 1]} : vector<8x10x128xf32> to vector<8x7x24xf32>
    %15 = arith.addf %13, %14 : vector<8x7x24xf32>
    %c0_5 = arith.constant 0 : index
    %c0_6 = arith.constant 0 : index
    %16 = vector.load %arg5[%c0_5, %c0_6] : memref<7x24xf32, #tpu.memory_space<vmem>>, vector<7x24xf32>
    %17 = vector.shape_cast %16 : vector<7x24xf32> to vector<1x7x24xf32>
    %18 = vector.broadcast %17 : vector<1x7x24xf32> to vector<8x7x24xf32>
    %19 = arith.addf %15, %18 : vector<8x7x24xf32>
    %cst_7 = arith.constant dense<0xFF800000> : vector<8x24xf32>
    %20 = vector.multi_reduction <maximumf>, %19, %cst_7 [1] : vector<8x7x24xf32> to vector<8x24xf32>
    %c0_8 = arith.constant 0 : index
    %c0_9 = arith.constant 0 : index
    %21 = vector.load %arg4[%c0_8, %c0_9] : memref<1x24xf32, #tpu.memory_space<vmem>>, vector<1x24xf32>
    %22 = vector.broadcast %21 : vector<1x24xf32> to vector<8x24xf32>
    %23 = arith.addf %20, %22 : vector<8x24xf32>
    %cst_10 = arith.constant 0.000000e+00 : f32
    %24 = vector.broadcast %cst_10 : f32 to vector<8x24xf32>
    %25 = arith.maximumf %23, %24 : vector<8x24xf32>
    %26 = arith.truncf %25 : vector<8x24xf32> to vector<8x24xbf16>
    %c0_11 = arith.constant 0 : index
    %c0_12 = arith.constant 0 : index
    %27 = vector.load %arg6[%c0_11, %c0_12] : memref<24x128xbf16, #tpu.memory_space<vmem>>, vector<24x128xbf16>
    %cst_13 = arith.constant dense<0.000000e+00> : vector<8x128xf32>
    %28 = tpu.matmul %26, %27, %cst_13 {dimension_numbers = #tpu.dot_dimension_numbers<[1], [0], [0], [1], [0, 0, 1, 1], [], []>} : vector<8x24xbf16>, vector<24x128xbf16>, vector<8x128xf32> -> vector<8x128xf32>
    %c0_14 = arith.constant 0 : index
    %c0_15 = arith.constant 0 : index
    %29 = vector.load %arg7[%c0_14, %c0_15] : memref<1x128xf32, #tpu.memory_space<vmem>>, vector<1x128xf32>
    %30 = vector.broadcast %29 : vector<1x128xf32> to vector<8x128xf32>
    %31 = arith.addf %28, %30 : vector<8x128xf32>
    %c0_16 = arith.constant 0 : index
    %c0_17 = arith.constant 0 : index
    %32 = vector.load %arg8[%c0_16, %c0_17] : memref<8x128xf32, #tpu.memory_space<vmem>>, vector<8x128xf32>
    tpu.vector_store %arg8[%c0_16, %c0_17], %31 {strides = array<i32>} : memref<8x128xf32, #tpu.memory_space<vmem>>, vector<8x128xf32>,
    return
  }
  func.func @transform_0(%arg0: i32, %arg1: memref<64xi32, #tpu.memory_space<smem>>) -> (i32, i32) {
    %c0_i32 = arith.constant 0 : i32
    %c0_i32_0 = arith.constant 0 : i32
    %c0_i32_1 = arith.constant 0 : i32
    return %c0_i32, %c0_i32_0 : i32, i32
  }
  func.func @transform_1(%arg0: i32, %arg1: memref<64xi32, #tpu.memory_space<smem>>) -> (i32, i32) {
    %c0_i32 = arith.constant 0 : i32
    %c0_i32_0 = arith.constant 0 : i32
    %c0_i32_1 = arith.constant 0 : i32
    return %c0_i32, %c0_i32_0 : i32, i32
  }
  func.func @transform_2(%arg0: i32, %arg1: memref<64xi32, #tpu.memory_space<smem>>) -> (i32, i32) {
    %c0_i32 = arith.constant 0 : i32
    %c0_i32_0 = arith.constant 0 : i32
    %c0_i32_1 = arith.constant 0 : i32
    return %c0_i32, %c0_i32_0 : i32, i32
  }
  func.func @transform_3(%arg0: i32, %arg1: memref<64xi32, #tpu.memory_space<smem>>) -> (i32, i32) {
    %c0_i32 = arith.constant 0 : i32
    %c0_i32_0 = arith.constant 0 : i32
    %c0_i32_1 = arith.constant 0 : i32
    return %c0_i32, %c0_i32_0 : i32, i32
  }
  func.func @transform_4(%arg0: i32, %arg1: memref<64xi32, #tpu.memory_space<smem>>) -> (i32, i32) {
    %c0_i32 = arith.constant 0 : i32
    %c0_i32_0 = arith.constant 0 : i32
    %c0_i32_1 = arith.constant 0 : i32
    return %c0_i32, %c0_i32_0 : i32, i32
  }
  func.func @transform_5(%arg0: i32, %arg1: memref<64xi32, #tpu.memory_space<smem>>) -> (i32, i32) {
    %c0_i32 = arith.constant 0 : i32
    %c0_i32_0 = arith.constant 0 : i32
    %c0_i32_1 = arith.constant 0 : i32
    return %c0_i32, %c0_i32_0 : i32, i32
  }
  func.func @transform_6(%arg0: i32, %arg1: memref<64xi32, #tpu.memory_space<smem>>) -> (i32, i32) {
    %c0_i32 = arith.constant 0 : i32
    %c0_i32_0 = arith.constant 0 : i32
    return %arg0, %c0_i32 : i32, i32
  }
}

</mosaic_0001>

<llo_original>
// kernel: tpu_custom_call.1
$region0: #{tpu_custom_call.1}
  #allocation0 [shape = 'u32[]', space=smem, size = 0x4, offset = 0x4, fixed_abs, tag = 'smem constant byte address 0x4 - core index']
  #allocation1 [shape = 'u32[144,128]{1,0:T(1,128)}', space=vmem, size = 0x12000, scoped, tag = 'internal scratch']
  #allocation2 [shape = 'f32[64,32]{1,0:T(8,128)}', space=vmem, size = 0x8000, scoped, tag = 'scratch operand']
  #allocation3 [shape = 's32[1]{0}', space=sflag, size = 0x4, scoped, tag = 'scoped memory for tpu_custom_call.1']
  #allocation4 [shape = 'u8[512]{0}', space=smem, size = 0x200, scoped, tag = 'prefetched SMEM operand 0']
  %s0 = inlined_call_operand.vmem [shape: s32[64], index: 0, kind: input, shape index: {}]
  %s1 = inlined_call_operand.vmem [shape: f32[50,32], index: 1, kind: input, shape index: {}]
  %s2 = inlined_call_operand.vmem [shape: bf16[32,128], index: 2, kind: input, shape index: {}]
  %s3 = inlined_call_operand.vmem [shape: f32[1,24], index: 3, kind: input, shape index: {}]
  %s4 = inlined_call_operand.vmem [shape: f32[7,24], index: 4, kind: input, shape index: {}]
  %s5 = inlined_call_operand.vmem [shape: bf16[24,128], index: 5, kind: input, shape index: {}]
  %s6 = inlined_call_operand.vmem [shape: f32[1,128], index: 6, kind: input, shape index: {}]
  %s7 = inlined_call_operand.hbm [shape: f32[8,128], index: 7, kind: output, shape index: {}]
  %s8 = sld [smem:[#allocation0]]
  $region41: #{tpu_custom_call.1} parent=0
    _
  %s10 = ssub.s32 1, %s8
  %s11 = scalar_select 0, %s10, %s8
  %s12 = sshll.u32 %s0, 4
  %s13 = int_to_ptr.vmem [resolvable:$true] %s12
  %15 = dma.vmem_to_smem %s13, 16, [#allocation4], [#allocation3]
  %16 = dma.done [#allocation3], 16
  %17 = sfence
  $region1: #{tpu_custom_call.1} parent=0
    #allocation5 [shape = 'u8[4096]{0}', space=vmem, size = 0x1000, scoped, tag = 'output window, operand 0, single buffered']
    #allocation6 [shape = 's32[1]{0}', space=sflag, size = 0x4, scoped, tag = 'scoped memory for tpu_custom_call.1']
    %18 = vsyncpa [#allocation6], 0
    // Predicated region
    $region2: #{tpu_custom_call.1} parent=1 // pred_check
      _
    $region3: #{tpu_custom_call.1} parent=1 // pred_check_branch
      %20 = sbr.rel (0) target = $region5
    $region4: #{tpu_custom_call.1} parent=1 // pred_region
      _
    $region5: #{tpu_custom_call.1} parent=1 // pred_fallthru
      _
    // Predicated region
    $region6: #{tpu_custom_call.1} parent=1 // pred_check
      _
    $region7: #{tpu_custom_call.1} parent=1 // pred_check_branch
      %22 = sbr.rel (0) target = $region9
    $region8: #{tpu_custom_call.1} parent=1 // pred_region
      _
    $region9: #{tpu_custom_call.1} parent=1 // pred_fallthru
      _
    // Predicated region
    $region10: #{tpu_custom_call.1} parent=1 // pred_check
      _
    $region11: #{tpu_custom_call.1} parent=1 // pred_check_branch
      %24 = sbr.rel (0) target = $region13
    $region12: #{tpu_custom_call.1} parent=1 // pred_region
      _
    $region13: #{tpu_custom_call.1} parent=1 // pred_fallthru
      _
    // Predicated region
    $region14: #{tpu_custom_call.1} parent=1 // pred_check
      _
    $region15: #{tpu_custom_call.1} parent=1 // pred_check_branch
      %26 = sbr.rel (0) target = $region17
    $region16: #{tpu_custom_call.1} parent=1 // pred_region
      _
    $region17: #{tpu_custom_call.1} parent=1 // pred_fallthru
      _
    // Predicated region
    $region18: #{tpu_custom_call.1} parent=1 // pred_check
      _
    $region19: #{tpu_custom_call.1} parent=1 // pred_check_branch
      %28 = sbr.rel (0) target = $region21
    $region20: #{tpu_custom_call.1} parent=1 // pred_region
      _
    $region21: #{tpu_custom_call.1} parent=1 // pred_fallthru
      _
    // Predicated region
    $region22: #{tpu_custom_call.1} parent=1 // pred_check
      _
    $region23: #{tpu_custom_call.1} parent=1 // pred_check_branch
      %30 = sbr.rel (0) target = $region25
    $region24: #{tpu_custom_call.1} parent=1 // pred_region
      _
    $region25: #{tpu_custom_call.1} parent=1 // pred_fallthru
      _
    %s32 = smul.u32 0, 64
    loop: start=0, step=1, limit=8
    $region26: #{tpu_custom_call.1} parent=1 // loop_pre_header
      _
    $region27: #{tpu_custom_call.1} parent=1 // loop_header
      %s34 = sphi 0, %s38
      %p35 = scmp.ge.s32.totalorder %s34, 8
    $region28: #{tpu_custom_call.1} parent=1 // loop_header_branch
      %37 = sbr.rel (%p35) target = $region32
    $region29: #{tpu_custom_call.1} parent=1 // loop_body
      %s39 = smul.u32 %s34, 8
      %s40 = sadd.s32 %s32, %s39
      %s41 = sld [smem:[#allocation4 + %s40]]
      %s42 = scalar_lea.vmem %s1, %s41
      %v43 = vld [vmem:[%s42] sm:$0x1]
      %s44 = sadd.s32 %s40, 1
      %s45 = sld [smem:[#allocation4 + %s44]]
      %s46 = scalar_lea.vmem %s1, %s45
      %v47 = vld [vmem:[%s46] sm:$0x1]
      %s48 = sadd.s32 %s40, 2
      %s49 = sld [smem:[#allocation4 + %s48]]
      %s50 = scalar_lea.vmem %s1, %s49
      %v51 = vld [vmem:[%s50] sm:$0x1]
      %s52 = sadd.s32 %s40, 3
      %s53 = sld [smem:[#allocation4 + %s52]]
      %s54 = scalar_lea.vmem %s1, %s53
      %v55 = vld [vmem:[%s54] sm:$0x1]
      %s56 = sadd.s32 %s40, 4
      %s57 = sld [smem:[#allocation4 + %s56]]
      %s58 = scalar_lea.vmem %s1, %s57
      %v59 = vld [vmem:[%s58] sm:$0x1]
      %s60 = sadd.s32 %s40, 5
      %s61 = sld [smem:[#allocation4 + %s60]]
      %s62 = scalar_lea.vmem %s1, %s61
      %v63 = vld [vmem:[%s62] sm:$0x1]
      %s64 = sadd.s32 %s40, 6
      %s65 = sld [smem:[#allocation4 + %s64]]
      %s66 = scalar_lea.vmem %s1, %s65
      %v67 = vld [vmem:[%s66] sm:$0x1]
      %s68 = sadd.s32 %s40, 7
      %s69 = sld [smem:[#allocation4 + %s68]]
      %s70 = scalar_lea.vmem %s1, %s69
      %v71 = vld [vmem:[%s70] sm:$0x1]
      %v73 = vrot.slane %v47, 7
      %v76 = vrot.slane %v51, 6
      %v79 = vrot.slane %v55, 5
      %v82 = vrot.slane %v59, 4
      %v85 = vrot.slane %v63, 3
      %v88 = vrot.slane %v67, 2
      %v91 = vrot.slane %v71, 1
      %vm93 = vcmask 1040384
      %v94 = vsel %vm93, %v43, %v73
      %vm95 = vcmask 1041408
      %v96 = vsel %vm95, %v94, %v76
      %vm97 = vcmask 1042432
      %v98 = vsel %vm97, %v96, %v79
      %vm99 = vcmask 1043456
      %v100 = vsel %vm99, %v98, %v82
      %vm101 = vcmask 1044480
      %v102 = vsel %vm101, %v100, %v85
      %vm103 = vcmask 1045504
      %v104 = vsel %vm103, %v102, %v88
      %vm105 = vcmask 1046528
      %v106 = vsel %vm105, %v104, %v91
      %s107 = scalar_lea.vmem [#allocation2], %s39
      %vm108 = vcmask 261120
      %109 = vst.msk [vmem:[%s107] sm:$0xff] %vm108, %v106
    $region30: #{tpu_custom_call.1} parent=1 // loop_footer
      %s38 = sadd.s32 1, %s34
    $region31: #{tpu_custom_call.1} parent=1 // loop_footer_branch
      %33 = sbr.rel target = $region27
    $region32: #{tpu_custom_call.1} parent=1 // loop_exit
      _
    %v110 = vld [vmem:[#allocation2] sm:$0xff]
    %v111 = vld [vmem:[#allocation2 + $0x8] sm:$0xff]
    %v112 = vld [vmem:[#allocation2 + $0x10] sm:$0xff]
    %v113 = vld [vmem:[#allocation2 + $0x18] sm:$0xff]
    %v114 = vld [vmem:[#allocation2 + $0x20] sm:$0xff]
    %v115 = vld [vmem:[#allocation2 + $0x28] sm:$0xff]
    %v116 = vld [vmem:[#allocation2 + $0x30] sm:$0xff]
    %v117 = vld [vmem:[#allocation2 + $0x38] sm:$0xff]
    %v118 = vpack.c.bf16 %v111, %v110
    %v119 = vpack.c.bf16 %v113, %v112
    %v120 = vpack.c.bf16 %v115, %v114
    %v121 = vpack.c.bf16 %v117, %v116
    %v122 = vld [vmem:[%s2] sm:$0xf]
    %v123 = vld [vmem:[%s2 + $0x4] sm:$0xf]
    %v124 = vld [vmem:[%s2 + $0x8] sm:$0xf]
    %v125 = vld [vmem:[%s2 + $0xc] sm:$0xf]
    %v130 = vunpack.c.l.b16 %v122
    %v131 = vunpack.c.l.b16 %v123
    %v132 = vunpack.c.l.b16 %v124
    %v133 = vunpack.c.l.b16 %v125
    %v134 = vpack.c.b16 %v131, %v130
    %v135 = vpack.c.b16 %v133, %v132
    %vm138 = vcmask 261120
    %v140 = vsel %vm138, %v118, 0
    %v143 = vsel %vm138, %v119, 0
    %v146 = vsel %vm138, %v120, 0
    %v149 = vsel %vm138, %v121, 0
    %151 = vmatprep.subr.bf16.mxu0 0
    %152 = vmatpush1.bf16.msra.mxu0 %v134
    %153 = vmatprep.subr.bf16.mxu0 0
    %154 = vmatpush1.bf16.msra.mxu0 %v135
    %155 = vmatprep.subr.bf16.mxu0 0
    %156 = vmatpush1.bf16.msra.mxu0 0
    %157 = vmatprep.subr.bf16.mxu0 0
    %158 = vmatpush1.bf16.msra.mxu0 0
    %159 = vmatprep.subr.bf16.mxu0 0
    %160 = vmatpush1.bf16.msra.mxu0 0
    %161 = vmatprep.subr.bf16.mxu0 0
    %162 = vmatpush1.bf16.msra.mxu0 0
    %163 = vmatprep.subr.bf16.mxu0 0
    %164 = vmatpush1.bf16.msra.mxu0 0
    %165 = vmatprep.subr.bf16.mxu0 0
    %166 = vmatpush1.bf16.msra.mxu0 0
    %167 = vmatprep.subr.bf16.mxu0 0
    %168 = vmatpush1.bf16.msra.mxu0 0
    %169 = vmatprep.subr.bf16.mxu0 0
    %170 = vmatpush1.bf16.msra.mxu0 0
    %171 = vmatprep.subr.bf16.mxu0 0
    %172 = vmatpush1.bf16.msra.mxu0 0
    %173 = vmatprep.subr.bf16.mxu0 0
    %174 = vmatpush1.bf16.msra.mxu0 0
    %175 = vmatprep.subr.bf16.mxu0 0
    %176 = vmatpush1.bf16.msra.mxu0 0
    %177 = vmatprep.subr.bf16.mxu0 0
    %178 = vmatpush1.bf16.msra.mxu0 0
    %179 = vmatprep.subr.bf16.mxu0 0
    %180 = vmatpush1.bf16.msra.mxu0 0
    %181 = vmatprep.subr.bf16.mxu0 0
    %182 = vmatpush1.bf16.msra.mxu0 0
    %183 = vmatprep.mubr.bf16.mxu0 0
    %184 = vmatmul.mubr.bf16.gmra.mrb[0].mxu0 %v140
    %v185 = vpop.f32.mrb[0].mxu0
    %v186 = vadd.f32 0.0, %v185
    %v187 = vpop.f32.mrb[0].mxu0
    %v188 = vpop.f32.mrb[0].mxu0
    %v189 = vadd.f32 0.0, %v188
    %v190 = vpop.f32.mrb[0].mxu0
    %191 = vmatprep.mubr.bf16.mxu0 0
    %192 = vmatmul.mubr.bf16.gmra.mrb[0].mxu0 %v143
    %v193 = vpop.f32.mrb[0].mxu0
    %v194 = vadd.f32 0.0, %v193
    %v195 = vpop.f32.mrb[0].mxu0
    %v196 = vpop.f32.mrb[0].mxu0
    %v197 = vadd.f32 0.0, %v196
    %v198 = vpop.f32.mrb[0].mxu0
    %199 = vmatprep.mubr.bf16.mxu0 0
    %200 = vmatmul.mubr.bf16.gmra.mrb[0].mxu0 %v146
    %v201 = vpop.f32.mrb[0].mxu0
    %v202 = vadd.f32 0.0, %v201
    %v203 = vpop.f32.mrb[0].mxu0
    %v204 = vpop.f32.mrb[0].mxu0
    %v205 = vadd.f32 0.0, %v204
    %v206 = vpop.f32.mrb[0].mxu0
    %207 = vmatprep.mubr.bf16.mxu0 0
    %208 = vmatmul.mubr.bf16.gmra.mrb[0].mxu0 %v149
    %v209 = vpop.f32.mrb[0].mxu0
    %v210 = vadd.f32 0.0, %v209
    %v211 = vpop.f32.mrb[0].mxu0
    %v212 = vpop.f32.mrb[0].mxu0
    %v213 = vadd.f32 0.0, %v212
    %v214 = vpop.f32.mrb[0].mxu0
    %215 = vdwg.mxu0
    %v224 = vrot.slane %v186, 1
    %v225 = vrot.slane %v189, 1
    %v226 = vrot.slane %v194, 1
    %v227 = vrot.slane %v197, 1
    %v228 = vrot.slane %v202, 1
    %v229 = vrot.slane %v205, 1
    %v230 = vrot.slane %v210, 1
    %v231 = vrot.slane %v213, 1
    %232 = vrot.lane.b32.xlu0 %v224, 104
    %v233 = vpop.permute.xlu0 %232
    %234 = vrot.lane.b32.xlu0 %v225, 104
    %v235 = vpop.permute.xlu0 %234
    %236 = vrot.lane.b32.xlu0 %v226, 104
    %v237 = vpop.permute.xlu0 %236
    %238 = vrot.lane.b32.xlu0 %v227, 104
    %v239 = vpop.permute.xlu0 %238
    %240 = vrot.lane.b32.xlu0 %v228, 104
    %v241 = vpop.permute.xlu0 %240
    %242 = vrot.lane.b32.xlu0 %v229, 104
    %v243 = vpop.permute.xlu0 %242
    %244 = vrot.lane.b32.xlu0 %v230, 104
    %v245 = vpop.permute.xlu0 %244
    %246 = vrot.lane.b32.xlu0 %v231, 104
    %v247 = vpop.permute.xlu0 %246
    %v256 = vadd.f32 %v186, %v233
    %v257 = vadd.f32 %v189, %v235
    %v258 = vadd.f32 %v194, %v237
    %v259 = vadd.f32 %v197, %v239
    %v260 = vadd.f32 %v202, %v241
    %v261 = vadd.f32 %v205, %v243
    %v262 = vadd.f32 %v210, %v245
    %v263 = vadd.f32 %v213, %v247
    %vm265 = vcmask 1045504
    %v266 = vrot.slane %v186, 2
    %v267 = vrot.slane 0.0, 2
    %v268 = vsel %vm265, %v266, %v267
    %v269 = vrot.slane %v189, 2
    %v270 = vsel %vm265, %v269, %v267
    %v271 = vrot.slane %v194, 2
    %v272 = vsel %vm265, %v271, %v267
    %v273 = vrot.slane %v197, 2
    %v274 = vsel %vm265, %v273, %v267
    %v275 = vrot.slane %v202, 2
    %v276 = vsel %vm265, %v275, %v267
    %v277 = vrot.slane %v205, 2
    %v278 = vsel %vm265, %v277, %v267
    %v279 = vrot.slane %v210, 2
    %v280 = vsel %vm265, %v279, %v267
    %v281 = vrot.slane %v213, 2
    %v282 = vsel %vm265, %v281, %v267
    %283 = vrot.lane.b32.xlu0 %v268, 80
    %v284 = vpop.permute.xlu0 %283
    %285 = vrot.lane.b32.xlu0 %v270, 80
    %v286 = vpop.permute.xlu0 %285
    %287 = vrot.lane.b32.xlu0 %v272, 80
    %v288 = vpop.permute.xlu0 %287
    %289 = vrot.lane.b32.xlu0 %v274, 80
    %v290 = vpop.permute.xlu0 %289
    %291 = vrot.lane.b32.xlu0 %v276, 80
    %v292 = vpop.permute.xlu0 %291
    %293 = vrot.lane.b32.xlu0 %v278, 80
    %v294 = vpop.permute.xlu0 %293
    %295 = vrot.lane.b32.xlu0 %v280, 80
    %v296 = vpop.permute.xlu0 %295
    %297 = vrot.lane.b32.xlu0 %v282, 80
    %v298 = vpop.permute.xlu0 %297
    %v307 = vadd.f32 %v256, %v284
    %v308 = vadd.f32 %v257, %v286
    %v309 = vadd.f32 %v258, %v288
    %v310 = vadd.f32 %v259, %v290
    %v311 = vadd.f32 %v260, %v292
    %v312 = vadd.f32 %v261, %v294
    %v313 = vadd.f32 %v262, %v296
    %v314 = vadd.f32 %v263, %v298
    %vm315 = vcmask 1044480
    %v316 = vrot.slane %v186, 3
    %v317 = vrot.slane 0.0, 3
    %v318 = vsel %vm315, %v316, %v317
    %v319 = vrot.slane %v189, 3
    %v320 = vsel %vm315, %v319, %v317
    %v321 = vrot.slane %v194, 3
    %v322 = vsel %vm315, %v321, %v317
    %v323 = vrot.slane %v197, 3
    %v324 = vsel %vm315, %v323, %v317
    %v325 = vrot.slane %v202, 3
    %v326 = vsel %vm315, %v325, %v317
    %v327 = vrot.slane %v205, 3
    %v328 = vsel %vm315, %v327, %v317
    %v329 = vrot.slane %v210, 3
    %v330 = vsel %vm315, %v329, %v317
    %v331 = vrot.slane %v213, 3
    %v332 = vsel %vm315, %v331, %v317
    %333 = vrot.lane.b32.xlu0 %v318, 56
    %v334 = vpop.permute.xlu0 %333
    %335 = vrot.lane.b32.xlu0 %v320, 56
    %v336 = vpop.permute.xlu0 %335
    %337 = vrot.lane.b32.xlu0 %v322, 56
    %v338 = vpop.permute.xlu0 %337
    %339 = vrot.lane.b32.xlu0 %v324, 56
    %v340 = vpop.permute.xlu0 %339
    %341 = vrot.lane.b32.xlu0 %v326, 56
    %v342 = vpop.permute.xlu0 %341
    %343 = vrot.lane.b32.xlu0 %v328, 56
    %v344 = vpop.permute.xlu0 %343
    %345 = vrot.lane.b32.xlu0 %v330, 56
    %v346 = vpop.permute.xlu0 %345
    %347 = vrot.lane.b32.xlu0 %v332, 56
    %v348 = vpop.permute.xlu0 %347
    %v357 = vadd.f32 %v307, %v334
    %v358 = vadd.f32 %v308, %v336
    %v359 = vadd.f32 %v309, %v338
    %v360 = vadd.f32 %v310, %v340
    %v361 = vadd.f32 %v311, %v342
    %v362 = vadd.f32 %v312, %v344
    %v363 = vadd.f32 %v313, %v346
    %v364 = vadd.f32 %v314, %v348
    %v365 = vld [vmem:[%s4] sm:$0x7f]
    %v366 = vadd.f32 %v357, %v365
    %v367 = vadd.f32 %v358, %v365
    %v368 = vadd.f32 %v359, %v365
    %v369 = vadd.f32 %v360, %v365
    %v370 = vadd.f32 %v361, %v365
    %v371 = vadd.f32 %v362, %v365
    %v372 = vadd.f32 %v363, %v365
    %v373 = vadd.f32 %v364, %v365
    %vm374 = vcmask 194560
    %v375 = vsel %vm374, %v366, -inf
    %v376 = vrot.slane %v375, 4
    %v377 = vmax.f32 %v375, %v376
    %v378 = vrot.slane %v377, 2
    %v379 = vmax.f32 %v377, %v378
    %v380 = vrot.slane %v379, 1
    %v381 = vmax.f32 %v379, %v380
    %v382 = vsel %vm374, %v367, -inf
    %v383 = vrot.slane %v382, 4
    %v384 = vmax.f32 %v382, %v383
    %v385 = vrot.slane %v384, 2
    %v386 = vmax.f32 %v384, %v385
    %v387 = vrot.slane %v386, 1
    %v388 = vmax.f32 %v386, %v387
    %v389 = vsel %vm374, %v368, -inf
    %v390 = vrot.slane %v389, 4
    %v391 = vmax.f32 %v389, %v390
    %v392 = vrot.slane %v391, 2
    %v393 = vmax.f32 %v391, %v392
    %v394 = vrot.slane %v393, 1
    %v395 = vmax.f32 %v393, %v394
    %v396 = vsel %vm374, %v369, -inf
    %v397 = vrot.slane %v396, 4
    %v398 = vmax.f32 %v396, %v397
    %v399 = vrot.slane %v398, 2
    %v400 = vmax.f32 %v398, %v399
    %v401 = vrot.slane %v400, 1
    %v402 = vmax.f32 %v400, %v401
    %v403 = vsel %vm374, %v370, -inf
    %v404 = vrot.slane %v403, 4
    %v405 = vmax.f32 %v403, %v404
    %v406 = vrot.slane %v405, 2
    %v407 = vmax.f32 %v405, %v406
    %v408 = vrot.slane %v407, 1
    %v409 = vmax.f32 %v407, %v408
    %v410 = vsel %vm374, %v371, -inf
    %v411 = vrot.slane %v410, 4
    %v412 = vmax.f32 %v410, %v411
    %v413 = vrot.slane %v412, 2
    %v414 = vmax.f32 %v412, %v413
    %v415 = vrot.slane %v414, 1
    %v416 = vmax.f32 %v414, %v415
    %v417 = vsel %vm374, %v372, -inf
    %v418 = vrot.slane %v417, 4
    %v419 = vmax.f32 %v417, %v418
    %v420 = vrot.slane %v419, 2
    %v421 = vmax.f32 %v419, %v420
    %v422 = vrot.slane %v421, 1
    %v423 = vmax.f32 %v421, %v422
    %v424 = vsel %vm374, %v373, -inf
    %v425 = vrot.slane %v424, 4
    %v426 = vmax.f32 %v424, %v425
    %v427 = vrot.slane %v426, 2
    %v428 = vmax.f32 %v426, %v427
    %v429 = vrot.slane %v428, 1
    %v430 = vmax.f32 %v428, %v429
    %v431 = vld [vmem:[%s3] sm:$0x1]
    %v433 = vlaneseq
    %v434 = vshrl.u32 %v433, 7
    %v435 = vsub.s32 0, %v434
    %v436 = vrot.slane %v431, %v435
    %v438 = vadd.f32 %v381, %v436
    %v439 = vadd.f32 %v388, %v436
    %v440 = vadd.f32 %v395, %v436
    %v441 = vadd.f32 %v402, %v436
    %v442 = vadd.f32 %v409, %v436
    %v443 = vadd.f32 %v416, %v436
    %v444 = vadd.f32 %v423, %v436
    %v445 = vadd.f32 %v430, %v436
    %v446 = vmax.f32 %v438, 0.0
    %v447 = vmax.f32 %v439, 0.0
    %v448 = vmax.f32 %v440, 0.0
    %v449 = vmax.f32 %v441, 0.0
    %v450 = vmax.f32 %v442, 0.0
    %v451 = vmax.f32 %v443, 0.0
    %v452 = vmax.f32 %v444, 0.0
    %v453 = vmax.f32 %v445, 0.0
    %v454 = vpack.c.bf16 %v446, %v446
    %v455 = vpack.c.bf16 %v447, %v447
    %v456 = vpack.c.bf16 %v448, %v448
    %v457 = vpack.c.bf16 %v449, %v449
    %v458 = vpack.c.bf16 %v450, %v450
    %v459 = vpack.c.bf16 %v451, %v451
    %v460 = vpack.c.bf16 %v452, %v452
    %v461 = vpack.c.bf16 %v453, %v453
    %v462 = vld [vmem:[%s5] sm:$0xf]
    %v463 = vld [vmem:[%s5 + $0x4] sm:$0xf]
    %v464 = vld [vmem:[%s5 + $0x8] sm:$0xf]
    %v465 = vld [vmem:[%s6] sm:$0x1]
    %v467 = vlaneseq
    %v468 = vshrl.u32 %v467, 7
    %v469 = vsub.s32 0, %v468
    %v470 = vrot.slane %v465, %v469
    %v480 = vunpack.c.l.b16 %v454
    %v481 = vunpack.c.l.b16 %v455
    %v482 = vunpack.c.l.b16 %v456
    %v483 = vunpack.c.l.b16 %v457
    %v484 = vunpack.c.l.b16 %v458
    %v485 = vunpack.c.l.b16 %v459
    %v486 = vunpack.c.l.b16 %v460
    %v487 = vunpack.c.l.b16 %v461
    %v488 = vrot.slane %v481, 7
    %vm489 = vcmask 1041409
    %v490 = vsel %vm489, %v488, %v480
    %v491 = vrot.slane %v482, 6
    %vm492 = vcmask 1042434
    %v493 = vsel %vm492, %v491, %v490
    %v494 = vrot.slane %v483, 5
    %vm495 = vcmask 1043459
    %v496 = vsel %vm495, %v494, %v493
    %v497 = vrot.slane %v484, 4
    %vm498 = vcmask 1044484
    %v499 = vsel %vm498, %v497, %v496
    %v500 = vrot.slane %v485, 3
    %vm501 = vcmask 1045509
    %v502 = vsel %vm501, %v500, %v499
    %v503 = vrot.slane %v486, 2
    %vm504 = vcmask 1046534
    %v505 = vsel %vm504, %v503, %v502
    %v506 = vrot.slane %v487, 1
    %vm507 = vcmask 1047559
    %v508 = vsel %vm507, %v506, %v505
    %v509 = vpack.c.b16 %v508, %v508
    %v513 = vunpack.c.l.b16 %v462
    %v514 = vunpack.c.l.b16 %v463
    %v515 = vunpack.c.l.b16 %v464
    %v516 = vpack.c.b16 %v514, %v513
    %v517 = vpack.c.b16 %v515, %v515
    %vm519 = vcmask 195584
    %v521 = vsel %vm519, %v509, 0
    %vm523 = vcmask 1043456
    %v525 = vsel %vm523, %v517, 0
    %527 = vmatprep.subr.bf16.mxu0 0
    %528 = vmatpush1.bf16.msra.mxu0 %v516
    %529 = vmatprep.subr.bf16.mxu0 0
    %530 = vmatpush1.bf16.msra.mxu0 %v525
    %531 = vmatprep.subr.bf16.mxu0 0
    %532 = vmatpush1.bf16.msra.mxu0 0
    %533 = vmatprep.subr.bf16.mxu0 0
    %534 = vmatpush1.bf16.msra.mxu0 0
    %535 = vmatprep.subr.bf16.mxu0 0
    %536 = vmatpush1.bf16.msra.mxu0 0
    %537 = vmatprep.subr.bf16.mxu0 0
    %538 = vmatpush1.bf16.msra.mxu0 0
    %539 = vmatprep.subr.bf16.mxu0 0
    %540 = vmatpush1.bf16.msra.mxu0 0
    %541 = vmatprep.subr.bf16.mxu0 0
    %542 = vmatpush1.bf16.msra.mxu0 0
    %543 = vmatprep.subr.bf16.mxu0 0
    %544 = vmatpush1.bf16.msra.mxu0 0
    %545 = vmatprep.subr.bf16.mxu0 0
    %546 = vmatpush1.bf16.msra.mxu0 0
    %547 = vmatprep.subr.bf16.mxu0 0
    %548 = vmatpush1.bf16.msra.mxu0 0
    %549 = vmatprep.subr.bf16.mxu0 0
    %550 = vmatpush1.bf16.msra.mxu0 0
    %551 = vmatprep.subr.bf16.mxu0 0
    %552 = vmatpush1.bf16.msra.mxu0 0
    %553 = vmatprep.subr.bf16.mxu0 0
    %554 = vmatpush1.bf16.msra.mxu0 0
    %555 = vmatprep.subr.bf16.mxu0 0
    %556 = vmatpush1.bf16.msra.mxu0 0
    %557 = vmatprep.subr.bf16.mxu0 0
    %558 = vmatpush1.bf16.msra.mxu0 0
    %559 = vmatprep.mubr.bf16.mxu0 0
    %560 = vmatmul.mubr.bf16.gmra.mrb[0].mxu0 %v521
    %v561 = vpop.f32.mrb[0].mxu0
    %v562 = vadd.f32 %v470, %v561
    %v563 = vpop.f32.mrb[0].mxu0
    %v564 = vpop.f32.mrb[0].mxu0
    %v565 = vpop.f32.mrb[0].mxu0
    %566 = vdwg.mxu0
    %567 = vst [vmem:[#allocation5] sm:$0xff] %v562
    // Predicated region
    $region33: #{tpu_custom_call.1} parent=1 // pred_check
      _
    $region34: #{tpu_custom_call.1} parent=1 // pred_check_branch
      %569 = sbr.rel (0) target = $region36
    $region35: #{tpu_custom_call.1} parent=1 // pred_region
      %s571 = ssub.s32 128, 128
      %572 = vsyncadd [#allocation6], %s571
      %s574 = sshll.u32 [#allocation5], 4
      %s575 = int_to_ptr.vmem [resolvable:$true] %s574
      %577 = dma.vmem_to_hbm [thread:$0]  %s575, 128, %s7, [#allocation6]
    $region36: #{tpu_custom_call.1} parent=1 // pred_fallthru
      _
    // Predicated region
    $region37: #{tpu_custom_call.1} parent=1 // pred_check
      _
    $region38: #{tpu_custom_call.1} parent=1 // pred_check_branch
      %579 = sbr.rel (0) target = $region40
    $region39: #{tpu_custom_call.1} parent=1 // pred_region
      %580 = dma.done [#allocation6], 128
    $region40: #{tpu_custom_call.1} parent=1 // pred_fallthru
      _
    %581 = vsyncpa [#allocation6], 1

</llo_original>
